<compile_context>
chip_gen: v5e
topology: v5e:2x2
jax: 0.10.0
libtpu: 0.0.40
codegen_flags: <defaults>
</compile_context>

<pallas_src>
import jax
import jax.numpy as jnp
from jax import lax
from jax.experimental import pallas as pl
from jax.experimental.pallas import tpu as pltpu


# --------------------------------------------------------------------------
# One-time parameter preparation (NOT in the per-call hot path).
# --------------------------------------------------------------------------
def prepare_params(params):
    """Convert PyTorch-layout parameters to kernel layout, once.

    Returns:
      w_ih : (input, hidden)   = W_ih^T
      w_hh : (hidden, hidden)  = W_hh^T
      b_h  : (1, hidden)       = b_ih + b_hh   (pre-summed)
      w_ho : (hidden, output)  = W_ho^T
      b_ho : (1, output)
    """
    hidden_size = params["w_hh"].shape[0]
    output_size = params["w_ho"].shape[0]
    return {
        "w_ih": params["w_ih"].T,
        "w_hh": params["w_hh"].T,
        "b_h": (params["b_ih"] + params["b_hh"]).reshape(1, hidden_size),
        "w_ho": params["w_ho"].T,
        "b_ho": params["b_ho"].reshape(1, output_size),
    }


_VMEM = pl.BlockSpec(memory_space=pltpu.MemorySpace.VMEM)


# --------------------------------------------------------------------------
# Single-step cell kernel (matches nbaRNN.forward exactly).
# --------------------------------------------------------------------------
def _cell_kernel(x_ref, h_ref, w_ih_ref, w_hh_ref, b_h_ref, w_ho_ref, b_ho_ref,
                 out_ref, h_out_ref):
    pre = (jnp.dot(x_ref[...], w_ih_ref[...],
                   preferred_element_type=jnp.float32)
           + jnp.dot(h_ref[...], w_hh_ref[...],
                     preferred_element_type=jnp.float32)
           + b_h_ref[...])
    h_new = jnp.tanh(pre)
    h_out_ref[...] = h_new.astype(h_out_ref.dtype)
    out_ref[...] = (jnp.dot(h_new, w_ho_ref[...],
                            preferred_element_type=jnp.float32)
                    + b_ho_ref[...]).astype(out_ref.dtype)


def nba_rnn_forward(x, h, prep):
    """Single nbaRNN step: returns (output, new_hidden)."""
    B = x.shape[0]
    hidden_size = prep["w_hh"].shape[0]
    output_size = prep["w_ho"].shape[1]

    out, h_new = pl.pallas_call(
        _cell_kernel,
        out_shape=(
            jax.ShapeDtypeStruct((B, output_size), x.dtype),
            jax.ShapeDtypeStruct((B, hidden_size), x.dtype),
        ),
        in_specs=[_VMEM] * 7,
        out_specs=(_VMEM, _VMEM),
    )(x, h, prep["w_ih"], prep["w_hh"], prep["b_h"], prep["w_ho"], prep["b_ho"])
    return out, h_new


# --------------------------------------------------------------------------
# Whole-sequence kernel: ONE pallas_call, NO grid.  Everything resident in
# VMEM; the recurrence is fully unrolled; the input and output projections
# are hoisted out of the serial path into two batched matmuls.
# --------------------------------------------------------------------------
def _seq_kernel(xs_ref, h0_ref, w_ih_ref, w_hh_ref, b_h_ref, w_ho_ref, b_ho_ref,
                ys_ref, hT_ref, xproj_ref, h_all_ref):
    B, H = h0_ref.shape
    T = xs_ref.shape[0] // B

    # (1) Hoisted input projection: one (T*B, IN) @ (IN, H) MXU matmul + bias,
    #     entirely off the serial critical path.  Parked in a VMEM scratch.
    xproj_ref[...] = (jnp.dot(xs_ref[...], w_ih_ref[...],
                              preferred_element_type=jnp.float32)
                      + b_h_ref[...])

    # (2) Serial recurrence, fully unrolled (T is small and static, so every
    #     slice offset below is a compile-time constant).  Per step only
    #     h @ W_hh and tanh remain on the critical path.
    w_hh = w_hh_ref[...]
    h = h0_ref[...].astype(jnp.float32)
    for t in range(T):
        pre = xproj_ref[t * B:(t + 1) * B, :] + jnp.dot(
            h, w_hh, preferred_element_type=jnp.float32)
        h = jnp.tanh(pre)
        h_all_ref[t * B:(t + 1) * B, :] = h
    hT_ref[...] = h.astype(hT_ref.dtype)

    # (3) Deferred output projection: one (T*B, H) @ (H, OUT) matmul + bias,
    #     written as a single slab instead of T tiny masked stores.
    ys_ref[...] = (jnp.dot(h_all_ref[...], w_ho_ref[...],
                           preferred_element_type=jnp.float32)
                   + b_ho_ref[...]).astype(ys_ref.dtype)


def nba_rnn_sequence(xs, h0, prep):
    """Run the nbaRNN cell over a whole sequence xs: (T, B, IN).

    Returns (outputs (T, B, OUT), final_hidden (B, H)).
    """
    T, B, IN = xs.shape
    H = prep["w_hh"].shape[0]
    OUT = prep["w_ho"].shape[1]

    # Free, contiguous reshapes done on the XLA side (no in-kernel reshape).
    xs2 = xs.reshape(T * B, IN)

    ys2, hT = pl.pallas_call(
        _seq_kernel,
        out_shape=(
            jax.ShapeDtypeStruct((T * B, OUT), xs.dtype),
            jax.ShapeDtypeStruct((B, H), xs.dtype),
        ),
        in_specs=[_VMEM] * 7,
        out_specs=(_VMEM, _VMEM),
        scratch_shapes=[
            pltpu.VMEM((T * B, H), jnp.float32),   # hoisted input projection
            pltpu.VMEM((T * B, H), jnp.float32),   # all hidden states h_t
        ],
    )(xs2, h0, prep["w_ih"], prep["w_hh"], prep["b_h"], prep["w_ho"],
      prep["b_ho"])
    return ys2.reshape(T, B, OUT), hT


# --------------------------------------------------------------------------
# Pure-JAX references (PyTorch layout).
# --------------------------------------------------------------------------
def _reference_forward(x, h, params):
    hidden = jnp.tanh(x @ params["w_ih"].T + params["b_ih"]
                      + h @ params["w_hh"].T + params["b_hh"])
    output = hidden @ params["w_ho"].T + params["b_ho"]
    return output, hidden


def _reference_sequence(xs, h0, params):
    def step(h, x):
        out, h_new = _reference_forward(x, h, params)
        return h_new, out
    hT, ys = lax.scan(step, h0, xs)
    return ys, hT


if __name__ == "__main__":
    input_size, hidden_size, output_size = 16, 32, 8
    batch, seq_len = 2, 8

    key = jax.random.PRNGKey(0)
    keys = jax.random.split(key, 8)

    # Deterministic synthetic parameters (PyTorch shape conventions).
    params = {
        "w_ih": jax.random.normal(keys[0], (hidden_size, input_size), jnp.float32) * 0.1,
        "b_ih": jax.random.normal(keys[1], (hidden_size,), jnp.float32) * 0.1,
        "w_hh": jax.random.normal(keys[2], (hidden_size, hidden_size), jnp.float32) * 0.1,
        "b_hh": jax.random.normal(keys[3], (hidden_size,), jnp.float32) * 0.1,
        "w_ho": jax.random.normal(keys[4], (output_size, hidden_size), jnp.float32) * 0.1,
        "b_ho": jax.random.normal(keys[5], (output_size,), jnp.float32) * 0.1,
    }

    # One-time kernel-layout parameter prep (outside the hot path).
    prep = prepare_params(params)

    x = jax.random.normal(keys[6], (batch, input_size), jnp.float32)
    xs = jax.random.normal(keys[7], (seq_len, batch, input_size), jnp.float32)
    h0 = jnp.zeros((batch, hidden_size), jnp.float32)   # init_hidden (broadcast over batch)

    # ---- single step (matches nbaRNN.forward) ----
    out, h1 = jax.jit(nba_rnn_forward)(x, h0, prep)
    jax.block_until_ready((out, h1))
    out_ref, h1_ref = _reference_forward(x, h0, params)
    assert jnp.allclose(out, out_ref, atol=1e-5), "single-step output mismatch"
    assert jnp.allclose(h1, h1_ref, atol=1e-5), "single-step hidden mismatch"

    # ---- full sequence in one grid-less pallas_call ----
    ys, hT = jax.jit(nba_rnn_sequence)(xs, h0, prep)
    jax.block_until_ready((ys, hT))
    ys_ref, hT_ref = _reference_sequence(xs, h0, params)
    assert jnp.allclose(ys, ys_ref, atol=1e-4), "sequence outputs mismatch"
    assert jnp.allclose(hT, hT_ref, atol=1e-4), "sequence final hidden mismatch"

    print("KERNEL_OK")
</pallas_src>

<mosaic_0001>
module attributes {stable_mosaic.version = 11 : i64} {
  func.func @_cell_kernel(%arg0: memref<2x16xf32, #tpu.memory_space<vmem>>, %arg1: memref<2x32xf32, #tpu.memory_space<vmem>>, %arg2: memref<16x32xf32, #tpu.memory_space<vmem>>, %arg3: memref<32x32xf32, #tpu.memory_space<vmem>>, %arg4: memref<1x32xf32, #tpu.memory_space<vmem>>, %arg5: memref<32x8xf32, #tpu.memory_space<vmem>>, %arg6: memref<1x8xf32, #tpu.memory_space<vmem>>, %arg7: memref<2x8xf32, #tpu.memory_space<vmem>>, %arg8: memref<2x32xf32, #tpu.memory_space<vmem>>) attributes {dimension_semantics = [], scalar_prefetch = 0 : i64, scratch_operands = 0 : i64, tpu.core_type = #tpu.core_type<tc>} {
    %c0 = arith.constant 0 : index
    %c0_0 = arith.constant 0 : index
    %0 = vector.load %arg0[%c0, %c0_0] : memref<2x16xf32, #tpu.memory_space<vmem>>, vector<2x16xf32>
    %c0_1 = arith.constant 0 : index
    %c0_2 = arith.constant 0 : index
    %1 = vector.load %arg2[%c0_1, %c0_2] : memref<16x32xf32, #tpu.memory_space<vmem>>, vector<16x32xf32>
    %cst = arith.constant dense<0.000000e+00> : vector<2x32xf32>
    %2 = tpu.matmul %0, %1, %cst {dimension_numbers = #tpu.dot_dimension_numbers<[1], [0], [0], [1], [0, 0, 1, 1], [], []>} : vector<2x16xf32>, vector<16x32xf32>, vector<2x32xf32> -> vector<2x32xf32>
    %c0_3 = arith.constant 0 : index
    %c0_4 = arith.constant 0 : index
    %3 = vector.load %arg1[%c0_3, %c0_4] : memref<2x32xf32, #tpu.memory_space<vmem>>, vector<2x32xf32>
    %c0_5 = arith.constant 0 : index
    %c0_6 = arith.constant 0 : index
    %4 = vector.load %arg3[%c0_5, %c0_6] : memref<32x32xf32, #tpu.memory_space<vmem>>, vector<32x32xf32>
    %cst_7 = arith.constant dense<0.000000e+00> : vector<2x32xf32>
    %5 = tpu.matmul %3, %4, %cst_7 {dimension_numbers = #tpu.dot_dimension_numbers<[1], [0], [0], [1], [0, 0, 1, 1], [], []>} : vector<2x32xf32>, vector<32x32xf32>, vector<2x32xf32> -> vector<2x32xf32>
    %6 = arith.addf %2, %5 : vector<2x32xf32>
    %c0_8 = arith.constant 0 : index
    %c0_9 = arith.constant 0 : index
    %7 = vector.load %arg4[%c0_8, %c0_9] : memref<1x32xf32, #tpu.memory_space<vmem>>, vector<1x32xf32>
    %8 = vector.broadcast %7 : vector<1x32xf32> to vector<2x32xf32>
    %9 = arith.addf %6, %8 : vector<2x32xf32>
    %10 = math.tanh %9 : vector<2x32xf32>
    %c0_10 = arith.constant 0 : index
    %c0_11 = arith.constant 0 : index
    %11 = vector.load %arg8[%c0_10, %c0_11] : memref<2x32xf32, #tpu.memory_space<vmem>>, vector<2x32xf32>
    tpu.vector_store %arg8[%c0_10, %c0_11], %10 {strides = array<i32>} : memref<2x32xf32, #tpu.memory_space<vmem>>, vector<2x32xf32>,
    %c0_12 = arith.constant 0 : index
    %c0_13 = arith.constant 0 : index
    %12 = vector.load %arg5[%c0_12, %c0_13] : memref<32x8xf32, #tpu.memory_space<vmem>>, vector<32x8xf32>
    %cst_14 = arith.constant dense<0.000000e+00> : vector<2x8xf32>
    %13 = tpu.matmul %10, %12, %cst_14 {dimension_numbers = #tpu.dot_dimension_numbers<[1], [0], [0], [1], [0, 0, 1, 1], [], []>} : vector<2x32xf32>, vector<32x8xf32>, vector<2x8xf32> -> vector<2x8xf32>
    %c0_15 = arith.constant 0 : index
    %c0_16 = arith.constant 0 : index
    %14 = vector.load %arg6[%c0_15, %c0_16] : memref<1x8xf32, #tpu.memory_space<vmem>>, vector<1x8xf32>
    %15 = vector.broadcast %14 : vector<1x8xf32> to vector<2x8xf32>
    %16 = arith.addf %13, %15 : vector<2x8xf32>
    %c0_17 = arith.constant 0 : index
    %c0_18 = arith.constant 0 : index
    %17 = vector.load %arg7[%c0_17, %c0_18] : memref<2x8xf32, #tpu.memory_space<vmem>>, vector<2x8xf32>
    tpu.vector_store %arg7[%c0_17, %c0_18], %16 {strides = array<i32>} : memref<2x8xf32, #tpu.memory_space<vmem>>, vector<2x8xf32>,
    return
  }
}

</mosaic_0001>

<llo_original>
// kernel: nba_rnn_forward.1
$region0: #{nba_rnn_forward.1}
  #allocation0 [shape = 'u32[]', space=smem, size = 0x4, offset = 0x4, fixed_abs, tag = 'smem constant byte address 0x4 - core index']
  #allocation1 [shape = 'u32[72,128]{1,0:T(1,128)}', space=vmem, size = 0x9000, scoped, tag = 'internal scratch']
  %s0 = inlined_call_operand.vmem [shape: f32[2,16], index: 0, kind: input, shape index: {}]
  %s1 = inlined_call_operand.vmem [shape: f32[2,32], index: 1, kind: input, shape index: {}]
  %s2 = inlined_call_operand.hbm [shape: f32[16,32], index: 2, kind: input, shape index: {}]
  %s3 = inlined_call_operand.vmem [shape: f32[32,32], index: 3, kind: input, shape index: {}]
  %s4 = inlined_call_operand.vmem [shape: f32[1,32], index: 4, kind: input, shape index: {}]
  %s5 = inlined_call_operand.vmem [shape: f32[32,8], index: 5, kind: input, shape index: {}]
  %s6 = inlined_call_operand.vmem [shape: f32[1,8], index: 6, kind: input, shape index: {}]
  %s7 = inlined_call_operand.hbm [shape: f32[2,8], index: 7, kind: output, shape index: {0}]
  %s8 = inlined_call_operand.hbm [shape: f32[2,32], index: 8, kind: output, shape index: {1}]
  %9 = xla_tuple %s7, %s8
  %s10 = sld [smem:[#allocation0]]
  $region50: #{nba_rnn_forward.1} parent=0
    _
  %s12 = ssub.s32 1, %s10
  %s13 = scalar_select 0, %s12, %s10
  $region1: #{nba_rnn_forward.1} parent=0
    #allocation2 [shape = 'u8[8192]{0}', space=vmem, size = 0x2000, scoped, tag = 'input window, operand 2, single buffered']
    #allocation3 [shape = 's32[1]{0}', space=sflag, size = 0x4, scoped, tag = 'scoped memory for nba_rnn_forward.1']
    #allocation4 [shape = 's32[1]{0}', space=sflag, size = 0x4, scoped, tag = 'scoped memory for nba_rnn_forward.1']
    #allocation5 [shape = 'u8[1024]{0}', space=vmem, size = 0x400, scoped, tag = 'output window, operand 0, single buffered']
    #allocation6 [shape = 'u8[1024]{0}', space=vmem, size = 0x400, scoped, tag = 'output window, operand 1, single buffered']
    #allocation7 [shape = 's32[1]{0}', space=sflag, size = 0x4, scoped, tag = 'scoped memory for nba_rnn_forward.1']
    %14 = vsyncpa [#allocation3], 0
    %15 = vsyncpa [#allocation4], 0
    %16 = vsyncpa [#allocation7], 0
    // Predicated region
    $region2: #{nba_rnn_forward.1} parent=1 // pred_check
      _
    $region3: #{nba_rnn_forward.1} parent=1 // pred_check_branch
      %18 = sbr.rel (0) target = $region5
    $region4: #{nba_rnn_forward.1} parent=1 // pred_region
      _
    $region5: #{nba_rnn_forward.1} parent=1 // pred_fallthru
      _
    // Predicated region
    $region6: #{nba_rnn_forward.1} parent=1 // pred_check
      _
    $region7: #{nba_rnn_forward.1} parent=1 // pred_check_branch
      %20 = sbr.rel (0) target = $region9
    $region8: #{nba_rnn_forward.1} parent=1 // pred_region
      _
    $region9: #{nba_rnn_forward.1} parent=1 // pred_fallthru
      _
    // Predicated region
    $region10: #{nba_rnn_forward.1} parent=1 // pred_check
      _
    $region11: #{nba_rnn_forward.1} parent=1 // pred_check_branch
      %22 = sbr.rel (0) target = $region13
    $region12: #{nba_rnn_forward.1} parent=1 // pred_region
      %24 = vsyncadd [#allocation3], 0
      %s25 = sshll.u32 %s2, 4
      %s26 = int_to_ptr.hbm [resolvable:$true] %s25
      %s27 = sshll.u32 [#allocation2], 4
      %s28 = int_to_ptr.vmem [resolvable:$true] %s27
      %33 = dma.hbm_to_vmem [thread:$0]  %s26, 256, %s28, [#allocation3], 128, 128, 8
    $region13: #{nba_rnn_forward.1} parent=1 // pred_fallthru
      _
    // Predicated region
    $region14: #{nba_rnn_forward.1} parent=1 // pred_check
      _
    $region15: #{nba_rnn_forward.1} parent=1 // pred_check_branch
      %35 = sbr.rel (0) target = $region17
    $region16: #{nba_rnn_forward.1} parent=1 // pred_region
      _
    $region17: #{nba_rnn_forward.1} parent=1 // pred_fallthru
      _
    // Predicated region
    $region18: #{nba_rnn_forward.1} parent=1 // pred_check
      _
    $region19: #{nba_rnn_forward.1} parent=1 // pred_check_branch
      %37 = sbr.rel (0) target = $region21
    $region20: #{nba_rnn_forward.1} parent=1 // pred_region
      _
    $region21: #{nba_rnn_forward.1} parent=1 // pred_fallthru
      _
    // Predicated region
    $region22: #{nba_rnn_forward.1} parent=1 // pred_check
      _
    $region23: #{nba_rnn_forward.1} parent=1 // pred_check_branch
      %39 = sbr.rel (0) target = $region25
    $region24: #{nba_rnn_forward.1} parent=1 // pred_region
      _
    $region25: #{nba_rnn_forward.1} parent=1 // pred_fallthru
      _
    // Predicated region
    $region26: #{nba_rnn_forward.1} parent=1 // pred_check
      _
    $region27: #{nba_rnn_forward.1} parent=1 // pred_check_branch
      %41 = sbr.rel (0) target = $region29
    $region28: #{nba_rnn_forward.1} parent=1 // pred_region
      _
    $region29: #{nba_rnn_forward.1} parent=1 // pred_fallthru
      _
    // Predicated region
    $region30: #{nba_rnn_forward.1} parent=1 // pred_check
      _
    $region31: #{nba_rnn_forward.1} parent=1 // pred_check_branch
      %43 = sbr.rel (0) target = $region33
    $region32: #{nba_rnn_forward.1} parent=1 // pred_region
      %45 = dma.done [#allocation3], 256
    $region33: #{nba_rnn_forward.1} parent=1 // pred_fallthru
      _
    %v46 = vld [vmem:[%s0] sm:$0x3]
    %v47 = vld [vmem:[#allocation2] sm:$0xff]
    %v48 = vld [vmem:[#allocation2 + $0x8] sm:$0xff]
    %v49 = vld [vmem:[%s1] sm:$0x3]
    %v50 = vld [vmem:[%s3] sm:$0xff]
    %v51 = vld [vmem:[%s3 + $0x8] sm:$0xff]
    %v52 = vld [vmem:[%s3 + $0x10] sm:$0xff]
    %v53 = vld [vmem:[%s3 + $0x18] sm:$0xff]
    %vm54 = vcmask 261120
    %v56 = vsel %vm54, %v49, 0
    %58 = vmatpush.msra.mxu0 0.0
    %59 = vmatpush.msra.mxu0 0.0
    %60 = vmatpush.msra.mxu0 0.0
    %61 = vmatpush.msra.mxu0 0.0
    %62 = vmatpush.msra.mxu0 0.0
    %63 = vmatpush.msra.mxu0 0.0
    %64 = vmatpush.msra.mxu0 0.0
    %65 = vmatpush.msra.mxu0 0.0
    %66 = vmatpush.msra.mxu0 0.0
    %67 = vmatpush.msra.mxu0 0.0
    %68 = vmatpush.msra.mxu0 0.0
    %69 = vmatpush.msra.mxu0 0.0
    %70 = vmatpush.msra.mxu0 %v53
    %71 = vmatpush.msra.mxu0 %v52
    %72 = vmatpush.msra.mxu0 %v51
    %73 = vmatpush.msra.mxu0 %v50
    %74 = vmatmul.f32.gmra.mxu0 %v56
    %v75 = vpop.f32.mrf.mxu0
    %v76 = vadd.f32 0.0, %v75
    %77 = vdwg.mxu0
    %vm78 = vcmask 130048
    %v80 = vsel %vm78, %v46, 0
    %82 = vmatpush.msra.mxu0 0.0
    %83 = vmatpush.msra.mxu0 0.0
    %84 = vmatpush.msra.mxu0 0.0
    %85 = vmatpush.msra.mxu0 0.0
    %86 = vmatpush.msra.mxu0 0.0
    %87 = vmatpush.msra.mxu0 0.0
    %88 = vmatpush.msra.mxu0 0.0
    %89 = vmatpush.msra.mxu0 0.0
    %90 = vmatpush.msra.mxu0 0.0
    %91 = vmatpush.msra.mxu0 0.0
    %92 = vmatpush.msra.mxu0 0.0
    %93 = vmatpush.msra.mxu0 0.0
    %94 = vmatpush.msra.mxu0 0.0
    %95 = vmatpush.msra.mxu0 0.0
    %96 = vmatpush.msra.mxu0 %v48
    %97 = vmatpush.msra.mxu0 %v47
    %98 = vmatmul.f32.gmra.mxu0 %v80
    %v99 = vpop.f32.mrf.mxu0
    %v100 = vadd.f32 %v76, %v99
    %101 = vdwg.mxu0
    %v102 = vld [vmem:[%s4] sm:$0x1]
    %v104 = vperm.slane %v102, 0
    %v106 = vadd.f32 %v100, %v104
    %v107 = vtanh.pop %v106
    %vm108 = vcmask 254976
    %109 = vst.msk [vmem:[#allocation6] sm:$0x3] %vm108, %v107
    %v110 = vld [vmem:[%s5] sm:$0xff]
    %v111 = vld [vmem:[%s5 + $0x8] sm:$0xff]
    %v112 = vld [vmem:[%s5 + $0x10] sm:$0xff]
    %v113 = vld [vmem:[%s5 + $0x18] sm:$0xff]
    %v114 = vld [vmem:[%s6] sm:$0x1]
    %v116 = vperm.slane %v114, 0
    %v119 = vsel %vm54, %v107, 0
    %121 = vmatpush.msra.mxu0 0.0
    %122 = vmatpush.msra.mxu0 0.0
    %123 = vmatpush.msra.mxu0 0.0
    %124 = vmatpush.msra.mxu0 0.0
    %125 = vmatpush.msra.mxu0 0.0
    %126 = vmatpush.msra.mxu0 0.0
    %127 = vmatpush.msra.mxu0 0.0
    %128 = vmatpush.msra.mxu0 0.0
    %129 = vmatpush.msra.mxu0 0.0
    %130 = vmatpush.msra.mxu0 0.0
    %131 = vmatpush.msra.mxu0 0.0
    %132 = vmatpush.msra.mxu0 0.0
    %133 = vmatpush.msra.mxu0 %v113
    %134 = vmatpush.msra.mxu0 %v112
    %135 = vmatpush.msra.mxu0 %v111
    %136 = vmatpush.msra.mxu0 %v110
    %137 = vmatmul.f32.gmra.mxu0 %v119
    %v138 = vpop.f32.mrf.mxu0
    %v139 = vadd.f32 %v116, %v138
    %140 = vdwg.mxu0
    %vm141 = vcmask 58368
    %142 = vst.msk [vmem:[#allocation5] sm:$0x3] %vm141, %v139
    // Predicated region
    $region34: #{nba_rnn_forward.1} parent=1 // pred_check
      _
    $region35: #{nba_rnn_forward.1} parent=1 // pred_check_branch
      %144 = sbr.rel (0) target = $region37
    $region36: #{nba_rnn_forward.1} parent=1 // pred_region
      %146 = vsyncadd [#allocation4], 0
      %s148 = sshll.u32 [#allocation5], 4
      %s149 = int_to_ptr.vmem [resolvable:$true] %s148
      %s150 = sshll.u32 %s7, 4
      %s151 = int_to_ptr.hbm [resolvable:$true] %s150
      %153 = dma.vmem_to_hbm [thread:$0]  %s149, 32, %s151, [#allocation4]
    $region37: #{nba_rnn_forward.1} parent=1 // pred_fallthru
      _
    // Predicated region
    $region38: #{nba_rnn_forward.1} parent=1 // pred_check
      _
    $region39: #{nba_rnn_forward.1} parent=1 // pred_check_branch
      %155 = sbr.rel (0) target = $region41
    $region40: #{nba_rnn_forward.1} parent=1 // pred_region
      %157 = vsyncadd [#allocation7], 0
      %s159 = sshll.u32 [#allocation6], 4
      %s160 = int_to_ptr.vmem [resolvable:$true] %s159
      %s161 = sshll.u32 %s8, 4
      %s162 = int_to_ptr.hbm [resolvable:$true] %s161
      %164 = dma.vmem_to_hbm [thread:$0]  %s160, 32, %s162, [#allocation7]
    $region41: #{nba_rnn_forward.1} parent=1 // pred_fallthru
      _
    // Predicated region
    $region42: #{nba_rnn_forward.1} parent=1 // pred_check
      _
    $region43: #{nba_rnn_forward.1} parent=1 // pred_check_branch
      %166 = sbr.rel (0) target = $region45
    $region44: #{nba_rnn_forward.1} parent=1 // pred_region
      %168 = dma.done [#allocation4], 32
    $region45: #{nba_rnn_forward.1} parent=1 // pred_fallthru
      _
    // Predicated region
    $region46: #{nba_rnn_forward.1} parent=1 // pred_check
      _
    $region47: #{nba_rnn_forward.1} parent=1 // pred_check_branch
      %170 = sbr.rel (0) target = $region49
    $region48: #{nba_rnn_forward.1} parent=1 // pred_region
      %172 = dma.done [#allocation7], 32
    $region49: #{nba_rnn_forward.1} parent=1 // pred_fallthru
      _
    %173 = vsyncpa [#allocation3], 1
    %174 = vsyncpa [#allocation4], 1
    %175 = vsyncpa [#allocation7], 1

</llo_original>
